<compile_context>
chip_gen: v7x
topology: tpu7x:2x2x1
jax: 0.10.0
libtpu: 0.0.40
codegen_flags: <defaults>
</compile_context>

<pallas_src>
import functools

import jax
import jax.numpy as jnp
from jax import lax
from jax.experimental import pallas as pl
from jax.experimental.pallas import tpu as pltpu

LANE = 128
MAX_BLOCK_ROWS = 4096   # 4096 x 128 f32 = 2 MiB per input buffer
NUM_SPLITS = 2          # leading "parallel" grid axis (both TCs on v7x)


def _dice_focal_kernel(p_ref, t_ref, out_ref, *, alpha, gamma, n_elems,
                       block_rows, steps_per_split, full_blocks, need_mask):
    """Accumulates per-split partial sums of [focal, sig*t, sig, t].

    p_ref/t_ref: (block_rows, 128) input tiles (any float/int dtype, cast here).
    out_ref:     (4, 8, 128) f32 VMEM output block for this grid split.  Its
                 block index only depends on the parallel axis, so it stays
                 resident across the inner ("arbitrary") axis and acts as the
                 accumulator; HBM writeback happens automatically.
    """
    c = pl.program_id(0)                 # split (parallel) index
    i = pl.program_id(1)                 # step within the split (arbitrary)
    g = c * steps_per_split + i          # global row-block id (unclamped)

    @pl.when(i == 0)
    def _init():
        out_ref[...] = jnp.zeros_like(out_ref)

    def accumulate(valid_mask):
        x = p_ref[...].astype(jnp.float32)
        t = t_ref[...].astype(jnp.float32)

        # Stable BCE-with-logits, reusing e = exp(-|x|) for the sigmoid too.
        e = jnp.exp(-jnp.abs(x))
        bce = jnp.maximum(x, 0.0) - x * t + jnp.log1p(e)
        pt = jnp.exp(-bce)
        omp = jnp.maximum(1.0 - pt, 0.0)

        # gamma == 2 (default) -> VPU square instead of EUP log+exp power.
        if gamma == 2.0:
            fpow = omp * omp
        elif float(gamma).is_integer() and 1.0 <= gamma <= 4.0:
            fpow = omp
            for _ in range(int(gamma) - 1):
                fpow = fpow * omp
        else:
            fpow = jnp.power(omp, gamma)
        focal = alpha * fpow * bce

        # sigmoid(x) from the already-computed e (no second exp):
        #   x >= 0: 1/(1+e),  x < 0: e/(1+e)
        sig = jnp.where(x >= 0.0, 1.0, e) / (1.0 + e)

        if valid_mask is not None:
            focal = jnp.where(valid_mask, focal, 0.0)
            sig = jnp.where(valid_mask, sig, 0.0)
            t = jnp.where(valid_mask, t, 0.0)
        inter = sig * t

        # Reduce (block_rows, 128) -> (8, 128) with VPU adds only; the final
        # cross-lane/sublane reduction is done in the wrapper.
        def r8(v):
            return jnp.sum(v.reshape(block_rows // 8, 8, LANE), axis=0)

        out_ref[0] += r8(focal)
        out_ref[1] += r8(inter)
        out_ref[2] += r8(sig)
        out_ref[3] += r8(t)

    if not need_mask:
        # Every block in the grid is fully valid: no masking anywhere.
        accumulate(None)
    else:
        if full_blocks > 0:
            @pl.when(g < full_blocks)
            def _fast():                 # interior blocks: mask-free path
                accumulate(None)

        @pl.when(g >= full_blocks)
        def _tail():                     # ragged tail / pad / ghost blocks
            row = lax.broadcasted_iota(jnp.int32, (block_rows, LANE), 0)
            col = lax.broadcasted_iota(jnp.int32, (block_rows, LANE), 1)
            # TODO(synk): int32 element indexing limits inputs to < 2**31 elems.
            idx = (g * block_rows + row) * LANE + col
            accumulate(idx < n_elems)


def dice_focal_loss(preds, targets, alpha=0.8, gamma=2.0, smooth=1e-8):
    assert preds.shape == targets.shape
    n_elems = int(preds.size)

    # Inputs are passed through in their native dtype (cast to f32 in-kernel),
    # so bf16 / int8 targets avoid a wrapper-side f32 widening copy.
    p_flat = preds.reshape(-1)
    t_flat = targets.reshape(-1)

    # Minimal tail pad so the flat stream reshapes to (rows, 128) with rows a
    # multiple of 8.  For typical NCHW shapes (and the demo) pad == 0, so no
    # extra HBM copies; the in-kernel mask handles the tail either way.
    sub_block = 8 * LANE
    padded = -(-n_elems // sub_block) * sub_block
    pad = padded - n_elems
    if pad:
        p_flat = jnp.pad(p_flat, (0, pad))
        t_flat = jnp.pad(t_flat, (0, pad))

    rows = padded // LANE
    p2 = p_flat.reshape(rows, LANE)
    t2 = t_flat.reshape(rows, LANE)

    block_rows = min(MAX_BLOCK_ROWS, rows)          # multiple of 8 by construction
    n_blocks = -(-rows // block_rows)               # real row-blocks
    steps = -(-n_blocks // NUM_SPLITS)              # inner (arbitrary) steps
    total_blocks = NUM_SPLITS * steps               # includes ghost blocks
    full_blocks = n_elems // (block_rows * LANE)    # fully-valid blocks
    need_mask = total_blocks > full_blocks

    def in_map(c, i):
        g = c * steps + i
        # Clamp ghost blocks (g >= n_blocks) onto the last real block; their
        # contribution is zeroed by the in-kernel mask.
        return (jnp.minimum(g, n_blocks - 1), 0)

    kernel = functools.partial(
        _dice_focal_kernel,
        alpha=float(alpha), gamma=float(gamma), n_elems=n_elems,
        block_rows=block_rows, steps_per_split=steps,
        full_blocks=full_blocks, need_mask=need_mask)

    partials = pl.pallas_call(
        kernel,
        out_shape=jax.ShapeDtypeStruct((NUM_SPLITS, 4, 8, LANE), jnp.float32),
        grid_spec=pltpu.PrefetchScalarGridSpec(
            num_scalar_prefetch=0,
            grid=(NUM_SPLITS, steps),
            in_specs=[
                pl.BlockSpec((block_rows, LANE), in_map),
                pl.BlockSpec((block_rows, LANE), in_map),
            ],
            out_specs=pl.BlockSpec((None, 4, 8, LANE),
                                   lambda c, i: (c, 0, 0, 0)),
        ),
        compiler_params=pltpu.CompilerParams(
            dimension_semantics=("parallel", "arbitrary"),
            # Working set: 2 inputs x 2 buffers x 2 MiB = 8 MiB (+16 KiB out
            # per split).  32 MiB scoped is safe on v5e/v6e (128 MiB physical)
            # and matches the v7x default (64 MiB physical).
            vmem_limit_bytes=32 * 1024 * 1024,
        ),
    )(p2, t2)

    # Tiny epilogue reduction in the wrapper: (NUM_SPLITS, 4, 8, 128) -> (4,)
    sums = jnp.sum(partials, axis=(0, 2, 3))
    focal_sum, intersection, pred_sum, targ_sum = sums[0], sums[1], sums[2], sums[3]

    focal_loss = focal_sum / n_elems
    dice_loss = 1.0 - (2.0 * intersection + smooth) / (pred_sum + targ_sum + smooth)
    return focal_loss + dice_loss


def _reference(preds, targets, alpha=0.8, gamma=2.0, smooth=1e-8):
    x = preds.astype(jnp.float32)
    t = targets.astype(jnp.float32)
    bce = jnp.maximum(x, 0.0) - x * t + jnp.log1p(jnp.exp(-jnp.abs(x)))
    pt = jnp.exp(-bce)
    focal = (alpha * (1.0 - pt) ** gamma * bce).mean()
    s = jax.nn.sigmoid(x)
    inter = (s * t).sum()
    dice = 1.0 - (2.0 * inter + smooth) / (s.sum() + t.sum() + smooth)
    return focal + dice


if __name__ == "__main__":
    key = jax.random.PRNGKey(0)
    k1, k2 = jax.random.split(key)
    # Segmentation-style inputs: (B, C, H, W)
    preds = jax.random.normal(k1, (2, 4, 16, 16), dtype=jnp.float32)
    targets = (jax.random.uniform(k2, (2, 4, 16, 16)) > 0.5).astype(jnp.float32)

    out = dice_focal_loss(preds, targets)
    out = jax.block_until_ready(out)

    ref = _reference(preds, targets)
    assert jnp.allclose(out, ref, rtol=1e-5, atol=1e-5), (out, ref)
    print("KERNEL_OK")
</pallas_src>

<mosaic_0001>
module attributes {stable_mosaic.version = 11 : i64} {
  func.func @_dice_focal_kernel(%arg0: i32, %arg1: i32, %arg2: memref<16x128xf32, #tpu.memory_space<vmem>>, %arg3: memref<16x128xf32, #tpu.memory_space<vmem>>, %arg4: memref<1x4x8x128xf32, #tpu.memory_space<vmem>>) attributes {dimension_semantics = [#tpu.dimension_semantics<parallel>, #tpu.dimension_semantics<arbitrary>], iteration_bounds = array<i64: 2, 1>, scalar_prefetch = 0 : i64, scratch_operands = 0 : i64, tpu.core_type = #tpu.core_type<tc>, window_params = [{transform_indices = @transform_0, window_bounds = array<i64: 16, 128>}, {transform_indices = @transform_1, window_bounds = array<i64: 16, 128>}, {transform_indices = @transform_2, window_bounds = array<i64: 1, 4, 8, 128>}]} {
    %c1_i32 = arith.constant 1 : i32
    %0 = arith.muli %arg0, %c1_i32 : i32
    %1 = arith.addi %0, %arg1 : i32
    %c0_i32 = arith.constant 0 : i32
    %2 = arith.cmpi eq, %arg1, %c0_i32 : i32
    %3 = arith.extui %2 : i1 to i32
    %c0_i32_0 = arith.constant 0 : i32
    %4 = arith.cmpi ne, %3, %c0_i32_0 : i32
    scf.if %4 {
      %cst = arith.constant 0.000000e+00 : f32
      %11 = vector.broadcast %cst : f32 to vector<4x8x128xf32>
      %c0 = arith.constant 0 : index
      %c0_5 = arith.constant 0 : index
      %c0_6 = arith.constant 0 : index
      %c0_7 = arith.constant 0 : index
      %12 = vector.load %arg4[%c0, %c0_5, %c0_6, %c0_7] : memref<1x4x8x128xf32, #tpu.memory_space<vmem>>, vector<1x4x8x128xf32>
      %13 = vector.shape_cast %12 : vector<1x4x8x128xf32> to vector<4x8x128xf32>
      %14 = vector.shape_cast %11 : vector<4x8x128xf32> to vector<1x4x8x128xf32>
      tpu.vector_store %arg4[%c0, %c0_5, %c0_6, %c0_7], %14 {strides = array<i32>} : memref<1x4x8x128xf32, #tpu.memory_space<vmem>>, vector<1x4x8x128xf32>,
    } else {
    }
    %c1_i32_1 = arith.constant 1 : i32
    %5 = arith.cmpi slt, %1, %c1_i32_1 : i32
    %6 = arith.extui %5 : i1 to i32
    %c0_i32_2 = arith.constant 0 : i32
    %7 = arith.cmpi ne, %6, %c0_i32_2 : i32
    scf.if %7 {
      %c0 = arith.constant 0 : index
      %c0_5 = arith.constant 0 : index
      %11 = vector.load %arg2[%c0, %c0_5] : memref<16x128xf32, #tpu.memory_space<vmem>>, vector<16x128xf32>
      %c0_6 = arith.constant 0 : index
      %c0_7 = arith.constant 0 : index
      %12 = vector.load %arg3[%c0_6, %c0_7] : memref<16x128xf32, #tpu.memory_space<vmem>>, vector<16x128xf32>
      %13 = math.absf %11 : vector<16x128xf32>
      %cst = arith.constant 0.000000e+00 : f32
      %14 = vector.broadcast %cst : f32 to vector<16x128xf32>
      %15 = arith.subf %14, %13 : vector<16x128xf32>
      %16 = math.exp %15 : vector<16x128xf32>
      %cst_8 = arith.constant 0.000000e+00 : f32
      %17 = vector.broadcast %cst_8 : f32 to vector<16x128xf32>
      %18 = arith.maximumf %11, %17 : vector<16x128xf32>
      %19 = arith.mulf %11, %12 : vector<16x128xf32>
      %20 = arith.subf %18, %19 : vector<16x128xf32>
      %21 = math.log1p %16 : vector<16x128xf32>
      %22 = arith.addf %20, %21 : vector<16x128xf32>
      %cst_9 = arith.constant 0.000000e+00 : f32
      %23 = vector.broadcast %cst_9 : f32 to vector<16x128xf32>
      %24 = arith.subf %23, %22 : vector<16x128xf32>
      %25 = math.exp %24 : vector<16x128xf32>
      %cst_10 = arith.constant 1.000000e+00 : f32
      %26 = vector.broadcast %cst_10 : f32 to vector<16x128xf32>
      %27 = arith.subf %26, %25 : vector<16x128xf32>
      %cst_11 = arith.constant 0.000000e+00 : f32
      %28 = vector.broadcast %cst_11 : f32 to vector<16x128xf32>
      %29 = arith.maximumf %27, %28 : vector<16x128xf32>
      %30 = arith.mulf %29, %29 : vector<16x128xf32>
      %cst_12 = arith.constant 8.000000e-01 : f32
      %31 = vector.broadcast %cst_12 : f32 to vector<16x128xf32>
      %32 = arith.mulf %31, %30 : vector<16x128xf32>
      %33 = arith.mulf %32, %22 : vector<16x128xf32>
      %cst_13 = arith.constant 0.000000e+00 : f32
      %34 = vector.broadcast %cst_13 : f32 to vector<16x128xf32>
      %35 = arith.cmpf oge, %11, %34 : vector<16x128xf32>
      %cst_14 = arith.constant 1.000000e+00 : f32
      %36 = vector.broadcast %cst_14 : f32 to vector<16x128xf32>
      %37 = arith.select %35, %36, %16 : vector<16x128xi1>, vector<16x128xf32>
      %cst_15 = arith.constant 1.000000e+00 : f32
      %38 = vector.broadcast %cst_15 : f32 to vector<16x128xf32>
      %39 = arith.addf %38, %16 : vector<16x128xf32>
      %40 = arith.divf %37, %39 : vector<16x128xf32>
      %41 = arith.mulf %40, %12 : vector<16x128xf32>
      %c0_16 = arith.constant 0 : index
      %c0_17 = arith.constant 0 : index
      %c0_18 = arith.constant 0 : index
      %c0_19 = arith.constant 0 : index
      %42 = vector.load %arg4[%c0_16, %c0_17, %c0_18, %c0_19] : memref<1x4x8x128xf32, #tpu.memory_space<vmem>>, vector<1x1x8x128xf32>
      %43 = vector.shape_cast %42 : vector<1x1x8x128xf32> to vector<8x128xf32>
      %44 = vector.shape_cast %33 : vector<16x128xf32> to vector<2x8x128xf32>
      %cst_20 = arith.constant dense<0.000000e+00> : vector<8x128xf32>
      %45 = vector.multi_reduction <add>, %44, %cst_20 [0] : vector<2x8x128xf32> to vector<8x128xf32>
      %46 = arith.addf %43, %45 : vector<8x128xf32>
      %c0_21 = arith.constant 0 : index
      %c0_22 = arith.constant 0 : index
      %c0_23 = arith.constant 0 : index
      %c0_24 = arith.constant 0 : index
      %47 = vector.load %arg4[%c0_21, %c0_22, %c0_23, %c0_24] : memref<1x4x8x128xf32, #tpu.memory_space<vmem>>, vector<1x1x8x128xf32>
      %48 = vector.shape_cast %47 : vector<1x1x8x128xf32> to vector<8x128xf32>
      %49 = vector.shape_cast %46 : vector<8x128xf32> to vector<1x1x8x128xf32>
      tpu.vector_store %arg4[%c0_21, %c0_22, %c0_23, %c0_24], %49 {strides = array<i32>} : memref<1x4x8x128xf32, #tpu.memory_space<vmem>>, vector<1x1x8x128xf32>,
      %c0_25 = arith.constant 0 : index
      %c1 = arith.constant 1 : index
      %c0_26 = arith.constant 0 : index
      %c0_27 = arith.constant 0 : index
      %50 = vector.load %arg4[%c0_25, %c1, %c0_26, %c0_27] : memref<1x4x8x128xf32, #tpu.memory_space<vmem>>, vector<1x1x8x128xf32>
      %51 = vector.shape_cast %50 : vector<1x1x8x128xf32> to vector<8x128xf32>
      %52 = vector.shape_cast %41 : vector<16x128xf32> to vector<2x8x128xf32>
      %cst_28 = arith.constant dense<0.000000e+00> : vector<8x128xf32>
      %53 = vector.multi_reduction <add>, %52, %cst_28 [0] : vector<2x8x128xf32> to vector<8x128xf32>
      %54 = arith.addf %51, %53 : vector<8x128xf32>
      %c0_29 = arith.constant 0 : index
      %c1_30 = arith.constant 1 : index
      %c0_31 = arith.constant 0 : index
      %c0_32 = arith.constant 0 : index
      %55 = vector.load %arg4[%c0_29, %c1_30, %c0_31, %c0_32] : memref<1x4x8x128xf32, #tpu.memory_space<vmem>>, vector<1x1x8x128xf32>
      %56 = vector.shape_cast %55 : vector<1x1x8x128xf32> to vector<8x128xf32>
      %57 = vector.shape_cast %54 : vector<8x128xf32> to vector<1x1x8x128xf32>
      tpu.vector_store %arg4[%c0_29, %c1_30, %c0_31, %c0_32], %57 {strides = array<i32>} : memref<1x4x8x128xf32, #tpu.memory_space<vmem>>, vector<1x1x8x128xf32>,
      %c0_33 = arith.constant 0 : index
      %c2 = arith.constant 2 : index
      %c0_34 = arith.constant 0 : index
      %c0_35 = arith.constant 0 : index
      %58 = vector.load %arg4[%c0_33, %c2, %c0_34, %c0_35] : memref<1x4x8x128xf32, #tpu.memory_space<vmem>>, vector<1x1x8x128xf32>
      %59 = vector.shape_cast %58 : vector<1x1x8x128xf32> to vector<8x128xf32>
      %60 = vector.shape_cast %40 : vector<16x128xf32> to vector<2x8x128xf32>
      %cst_36 = arith.constant dense<0.000000e+00> : vector<8x128xf32>
      %61 = vector.multi_reduction <add>, %60, %cst_36 [0] : vector<2x8x128xf32> to vector<8x128xf32>
      %62 = arith.addf %59, %61 : vector<8x128xf32>
      %c0_37 = arith.constant 0 : index
      %c2_38 = arith.constant 2 : index
      %c0_39 = arith.constant 0 : index
      %c0_40 = arith.constant 0 : index
      %63 = vector.load %arg4[%c0_37, %c2_38, %c0_39, %c0_40] : memref<1x4x8x128xf32, #tpu.memory_space<vmem>>, vector<1x1x8x128xf32>
      %64 = vector.shape_cast %63 : vector<1x1x8x128xf32> to vector<8x128xf32>
      %65 = vector.shape_cast %62 : vector<8x128xf32> to vector<1x1x8x128xf32>
      tpu.vector_store %arg4[%c0_37, %c2_38, %c0_39, %c0_40], %65 {strides = array<i32>} : memref<1x4x8x128xf32, #tpu.memory_space<vmem>>, vector<1x1x8x128xf32>,
      %c0_41 = arith.constant 0 : index
      %c3 = arith.constant 3 : index
      %c0_42 = arith.constant 0 : index
      %c0_43 = arith.constant 0 : index
      %66 = vector.load %arg4[%c0_41, %c3, %c0_42, %c0_43] : memref<1x4x8x128xf32, #tpu.memory_space<vmem>>, vector<1x1x8x128xf32>
      %67 = vector.shape_cast %66 : vector<1x1x8x128xf32> to vector<8x128xf32>
      %68 = vector.shape_cast %12 : vector<16x128xf32> to vector<2x8x128xf32>
      %cst_44 = arith.constant dense<0.000000e+00> : vector<8x128xf32>
      %69 = vector.multi_reduction <add>, %68, %cst_44 [0] : vector<2x8x128xf32> to vector<8x128xf32>
      %70 = arith.addf %67, %69 : vector<8x128xf32>
      %c0_45 = arith.constant 0 : index
      %c3_46 = arith.constant 3 : index
      %c0_47 = arith.constant 0 : index
      %c0_48 = arith.constant 0 : index
      %71 = vector.load %arg4[%c0_45, %c3_46, %c0_47, %c0_48] : memref<1x4x8x128xf32, #tpu.memory_space<vmem>>, vector<1x1x8x128xf32>
      %72 = vector.shape_cast %71 : vector<1x1x8x128xf32> to vector<8x128xf32>
      %73 = vector.shape_cast %70 : vector<8x128xf32> to vector<1x1x8x128xf32>
      tpu.vector_store %arg4[%c0_45, %c3_46, %c0_47, %c0_48], %73 {strides = array<i32>} : memref<1x4x8x128xf32, #tpu.memory_space<vmem>>, vector<1x1x8x128xf32>,
    } else {
    }
    %c1_i32_3 = arith.constant 1 : i32
    %8 = arith.cmpi sge, %1, %c1_i32_3 : i32
    %9 = arith.extui %8 : i1 to i32
    %c0_i32_4 = arith.constant 0 : i32
    %10 = arith.cmpi ne, %9, %c0_i32_4 : i32
    scf.if %10 {
      %11 = tpu.iota {dimensions = array<i32: 0>} : vector<16x128xi32>
      %12 = tpu.iota {dimensions = array<i32: 1>} : vector<16x128xi32>
      %c16_i32 = arith.constant 16 : i32
      %13 = arith.muli %1, %c16_i32 : i32
      %14 = vector.broadcast %13 : i32 to vector<16x128xi32>
      %15 = arith.addi %14, %11 : vector<16x128xi32>
      %c128_i32 = arith.constant 128 : i32
      %16 = vector.broadcast %c128_i32 : i32 to vector<16x128xi32>
      %17 = arith.muli %15, %16 : vector<16x128xi32>
      %18 = arith.addi %17, %12 : vector<16x128xi32>
      %c2048_i32 = arith.constant 2048 : i32
      %19 = vector.broadcast %c2048_i32 : i32 to vector<16x128xi32>
      %20 = arith.cmpi slt, %18, %19 : vector<16x128xi32>
      %c0 = arith.constant 0 : index
      %c0_5 = arith.constant 0 : index
      %21 = vector.load %arg2[%c0, %c0_5] : memref<16x128xf32, #tpu.memory_space<vmem>>, vector<16x128xf32>
      %c0_6 = arith.constant 0 : index
      %c0_7 = arith.constant 0 : index
      %22 = vector.load %arg3[%c0_6, %c0_7] : memref<16x128xf32, #tpu.memory_space<vmem>>, vector<16x128xf32>
      %23 = math.absf %21 : vector<16x128xf32>
      %cst = arith.constant 0.000000e+00 : f32
      %24 = vector.broadcast %cst : f32 to vector<16x128xf32>
      %25 = arith.subf %24, %23 : vector<16x128xf32>
      %26 = math.exp %25 : vector<16x128xf32>
      %cst_8 = arith.constant 0.000000e+00 : f32
      %27 = vector.broadcast %cst_8 : f32 to vector<16x128xf32>
      %28 = arith.maximumf %21, %27 : vector<16x128xf32>
      %29 = arith.mulf %21, %22 : vector<16x128xf32>
      %30 = arith.subf %28, %29 : vector<16x128xf32>
      %31 = math.log1p %26 : vector<16x128xf32>
      %32 = arith.addf %30, %31 : vector<16x128xf32>
      %cst_9 = arith.constant 0.000000e+00 : f32
      %33 = vector.broadcast %cst_9 : f32 to vector<16x128xf32>
      %34 = arith.subf %33, %32 : vector<16x128xf32>
      %35 = math.exp %34 : vector<16x128xf32>
      %cst_10 = arith.constant 1.000000e+00 : f32
      %36 = vector.broadcast %cst_10 : f32 to vector<16x128xf32>
      %37 = arith.subf %36, %35 : vector<16x128xf32>
      %cst_11 = arith.constant 0.000000e+00 : f32
      %38 = vector.broadcast %cst_11 : f32 to vector<16x128xf32>
      %39 = arith.maximumf %37, %38 : vector<16x128xf32>
      %40 = arith.mulf %39, %39 : vector<16x128xf32>
      %cst_12 = arith.constant 8.000000e-01 : f32
      %41 = vector.broadcast %cst_12 : f32 to vector<16x128xf32>
      %42 = arith.mulf %41, %40 : vector<16x128xf32>
      %43 = arith.mulf %42, %32 : vector<16x128xf32>
      %cst_13 = arith.constant 0.000000e+00 : f32
      %44 = vector.broadcast %cst_13 : f32 to vector<16x128xf32>
      %45 = arith.cmpf oge, %21, %44 : vector<16x128xf32>
      %cst_14 = arith.constant 1.000000e+00 : f32
      %46 = vector.broadcast %cst_14 : f32 to vector<16x128xf32>
      %47 = arith.select %45, %46, %26 : vector<16x128xi1>, vector<16x128xf32>
      %cst_15 = arith.constant 1.000000e+00 : f32
      %48 = vector.broadcast %cst_15 : f32 to vector<16x128xf32>
      %49 = arith.addf %48, %26 : vector<16x128xf32>
      %50 = arith.divf %47, %49 : vector<16x128xf32>
      %cst_16 = arith.constant 0.000000e+00 : f32
      %51 = vector.broadcast %cst_16 : f32 to vector<16x128xf32>
      %52 = arith.select %20, %43, %51 : vector<16x128xi1>, vector<16x128xf32>
      %cst_17 = arith.constant 0.000000e+00 : f32
      %53 = vector.broadcast %cst_17 : f32 to vector<16x128xf32>
      %54 = arith.select %20, %50, %53 : vector<16x128xi1>, vector<16x128xf32>
      %cst_18 = arith.constant 0.000000e+00 : f32
      %55 = vector.broadcast %cst_18 : f32 to vector<16x128xf32>
      %56 = arith.select %20, %22, %55 : vector<16x128xi1>, vector<16x128xf32>
      %57 = arith.mulf %54, %56 : vector<16x128xf32>
      %c0_19 = arith.constant 0 : index
      %c0_20 = arith.constant 0 : index
      %c0_21 = arith.constant 0 : index
      %c0_22 = arith.constant 0 : index
      %58 = vector.load %arg4[%c0_19, %c0_20, %c0_21, %c0_22] : memref<1x4x8x128xf32, #tpu.memory_space<vmem>>, vector<1x1x8x128xf32>
      %59 = vector.shape_cast %58 : vector<1x1x8x128xf32> to vector<8x128xf32>
      %60 = vector.shape_cast %52 : vector<16x128xf32> to vector<2x8x128xf32>
      %cst_23 = arith.constant dense<0.000000e+00> : vector<8x128xf32>
      %61 = vector.multi_reduction <add>, %60, %cst_23 [0] : vector<2x8x128xf32> to vector<8x128xf32>
      %62 = arith.addf %59, %61 : vector<8x128xf32>
      %c0_24 = arith.constant 0 : index
      %c0_25 = arith.constant 0 : index
      %c0_26 = arith.constant 0 : index
      %c0_27 = arith.constant 0 : index
      %63 = vector.load %arg4[%c0_24, %c0_25, %c0_26, %c0_27] : memref<1x4x8x128xf32, #tpu.memory_space<vmem>>, vector<1x1x8x128xf32>
      %64 = vector.shape_cast %63 : vector<1x1x8x128xf32> to vector<8x128xf32>
      %65 = vector.shape_cast %62 : vector<8x128xf32> to vector<1x1x8x128xf32>
      tpu.vector_store %arg4[%c0_24, %c0_25, %c0_26, %c0_27], %65 {strides = array<i32>} : memref<1x4x8x128xf32, #tpu.memory_space<vmem>>, vector<1x1x8x128xf32>,
      %c0_28 = arith.constant 0 : index
      %c1 = arith.constant 1 : index
      %c0_29 = arith.constant 0 : index
      %c0_30 = arith.constant 0 : index
      %66 = vector.load %arg4[%c0_28, %c1, %c0_29, %c0_30] : memref<1x4x8x128xf32, #tpu.memory_space<vmem>>, vector<1x1x8x128xf32>
      %67 = vector.shape_cast %66 : vector<1x1x8x128xf32> to vector<8x128xf32>
      %68 = vector.shape_cast %57 : vector<16x128xf32> to vector<2x8x128xf32>
      %cst_31 = arith.constant dense<0.000000e+00> : vector<8x128xf32>
      %69 = vector.multi_reduction <add>, %68, %cst_31 [0] : vector<2x8x128xf32> to vector<8x128xf32>
      %70 = arith.addf %67, %69 : vector<8x128xf32>
      %c0_32 = arith.constant 0 : index
      %c1_33 = arith.constant 1 : index
      %c0_34 = arith.constant 0 : index
      %c0_35 = arith.constant 0 : index
      %71 = vector.load %arg4[%c0_32, %c1_33, %c0_34, %c0_35] : memref<1x4x8x128xf32, #tpu.memory_space<vmem>>, vector<1x1x8x128xf32>
      %72 = vector.shape_cast %71 : vector<1x1x8x128xf32> to vector<8x128xf32>
      %73 = vector.shape_cast %70 : vector<8x128xf32> to vector<1x1x8x128xf32>
      tpu.vector_store %arg4[%c0_32, %c1_33, %c0_34, %c0_35], %73 {strides = array<i32>} : memref<1x4x8x128xf32, #tpu.memory_space<vmem>>, vector<1x1x8x128xf32>,
      %c0_36 = arith.constant 0 : index
      %c2 = arith.constant 2 : index
      %c0_37 = arith.constant 0 : index
      %c0_38 = arith.constant 0 : index
      %74 = vector.load %arg4[%c0_36, %c2, %c0_37, %c0_38] : memref<1x4x8x128xf32, #tpu.memory_space<vmem>>, vector<1x1x8x128xf32>
      %75 = vector.shape_cast %74 : vector<1x1x8x128xf32> to vector<8x128xf32>
      %76 = vector.shape_cast %54 : vector<16x128xf32> to vector<2x8x128xf32>
      %cst_39 = arith.constant dense<0.000000e+00> : vector<8x128xf32>
      %77 = vector.multi_reduction <add>, %76, %cst_39 [0] : vector<2x8x128xf32> to vector<8x128xf32>
      %78 = arith.addf %75, %77 : vector<8x128xf32>
      %c0_40 = arith.constant 0 : index
      %c2_41 = arith.constant 2 : index
      %c0_42 = arith.constant 0 : index
      %c0_43 = arith.constant 0 : index
      %79 = vector.load %arg4[%c0_40, %c2_41, %c0_42, %c0_43] : memref<1x4x8x128xf32, #tpu.memory_space<vmem>>, vector<1x1x8x128xf32>
      %80 = vector.shape_cast %79 : vector<1x1x8x128xf32> to vector<8x128xf32>
      %81 = vector.shape_cast %78 : vector<8x128xf32> to vector<1x1x8x128xf32>
      tpu.vector_store %arg4[%c0_40, %c2_41, %c0_42, %c0_43], %81 {strides = array<i32>} : memref<1x4x8x128xf32, #tpu.memory_space<vmem>>, vector<1x1x8x128xf32>,
      %c0_44 = arith.constant 0 : index
      %c3 = arith.constant 3 : index
      %c0_45 = arith.constant 0 : index
      %c0_46 = arith.constant 0 : index
      %82 = vector.load %arg4[%c0_44, %c3, %c0_45, %c0_46] : memref<1x4x8x128xf32, #tpu.memory_space<vmem>>, vector<1x1x8x128xf32>
      %83 = vector.shape_cast %82 : vector<1x1x8x128xf32> to vector<8x128xf32>
      %84 = vector.shape_cast %56 : vector<16x128xf32> to vector<2x8x128xf32>
      %cst_47 = arith.constant dense<0.000000e+00> : vector<8x128xf32>
      %85 = vector.multi_reduction <add>, %84, %cst_47 [0] : vector<2x8x128xf32> to vector<8x128xf32>
      %86 = arith.addf %83, %85 : vector<8x128xf32>
      %c0_48 = arith.constant 0 : index
      %c3_49 = arith.constant 3 : index
      %c0_50 = arith.constant 0 : index
      %c0_51 = arith.constant 0 : index
      %87 = vector.load %arg4[%c0_48, %c3_49, %c0_50, %c0_51] : memref<1x4x8x128xf32, #tpu.memory_space<vmem>>, vector<1x1x8x128xf32>
      %88 = vector.shape_cast %87 : vector<1x1x8x128xf32> to vector<8x128xf32>
      %89 = vector.shape_cast %86 : vector<8x128xf32> to vector<1x1x8x128xf32>
      tpu.vector_store %arg4[%c0_48, %c3_49, %c0_50, %c0_51], %89 {strides = array<i32>} : memref<1x4x8x128xf32, #tpu.memory_space<vmem>>, vector<1x1x8x128xf32>,
    } else {
    }
    return
  }
  func.func @transform_0(%arg0: i32, %arg1: i32) -> (i32, i32) {
    %c1_i32 = arith.constant 1 : i32
    %0 = arith.muli %arg0, %c1_i32 : i32
    %1 = arith.addi %0, %arg1 : i32
    %c0_i32 = arith.constant 0 : i32
    %2 = arith.minsi %1, %c0_i32 : i32
    %c0_i32_0 = arith.constant 0 : i32
    %c0_i32_1 = arith.constant 0 : i32
    return %2, %c0_i32_0 : i32, i32
  }
  func.func @transform_1(%arg0: i32, %arg1: i32) -> (i32, i32) {
    %c1_i32 = arith.constant 1 : i32
    %0 = arith.muli %arg0, %c1_i32 : i32
    %1 = arith.addi %0, %arg1 : i32
    %c0_i32 = arith.constant 0 : i32
    %2 = arith.minsi %1, %c0_i32 : i32
    %c0_i32_0 = arith.constant 0 : i32
    %c0_i32_1 = arith.constant 0 : i32
    return %2, %c0_i32_0 : i32, i32
  }
  func.func @transform_2(%arg0: i32, %arg1: i32) -> (i32, i32, i32, i32) {
    %c0_i32 = arith.constant 0 : i32
    %c0_i32_0 = arith.constant 0 : i32
    %c0_i32_1 = arith.constant 0 : i32
    %c0_i32_2 = arith.constant 0 : i32
    return %arg0, %c0_i32, %c0_i32_0, %c0_i32_1 : i32, i32, i32, i32
  }
}

</mosaic_0001>

<llo_original>
// kernel: tpu_custom_call.1
$region0: #{tpu_custom_call.1}
  #allocation0 [shape = 'u32[]', space=smem, size = 0x4, offset = 0x4, fixed_abs, tag = 'smem constant byte address 0x4 - core index']
  #allocation1 [shape = 'u32[144,128]{1,0:T(1,128)}', space=vmem, size = 0x12000, scoped, tag = 'internal scratch']
  %s0 = inlined_call_operand.hbm [shape: f32[16,128], index: 0, kind: input, shape index: {}]
  %s1 = inlined_call_operand.hbm [shape: f32[16,128], index: 1, kind: input, shape index: {}]
  %s2 = inlined_call_operand.hbm [shape: f32[2,4,8,128], index: 2, kind: output, shape index: {}]
  %s3 = sld [smem:[#allocation0]]
  $region61: #{tpu_custom_call.1} parent=0
    _
  %s5 = ssub.s32 1, %s3
  %s6 = scalar_select 0, %s5, %s3
  $region1: #{tpu_custom_call.1} parent=0
    #allocation2 [shape = 'u8[16384]{0}', space=vmem, size = 0x4000, scoped, tag = 'input window, operand 0']
    #allocation3 [shape = 's32[2]{0}', space=sflag, size = 0x8, scoped, tag = 'scoped memory for tpu_custom_call.1']
    #allocation4 [shape = 's32[2]{0}', space=sflag, size = 0x8, scoped, tag = 'scoped memory for tpu_custom_call.1']
    #allocation5 [shape = 'u8[16384]{0}', space=vmem, size = 0x4000, scoped, tag = 'input window, operand 1']
    #allocation6 [shape = 's32[2]{0}', space=sflag, size = 0x8, scoped, tag = 'scoped memory for tpu_custom_call.1']
    #allocation7 [shape = 'u8[32768]{0}', space=vmem, size = 0x8000, scoped, tag = 'output window, operand 0']
    %7 = vsyncpa [#allocation3], 0
    %s8 = scalar_lea.sflag [#allocation3], 1
    %9 = vsyncpa %s8, 0
    %10 = vsyncpa [#allocation6], 0
    %s11 = scalar_lea.sflag [#allocation6], 1
    %12 = vsyncpa %s11, 0
    %13 = vsyncpa [#allocation4], 0
    %s14 = scalar_lea.sflag [#allocation4], 1
    %15 = vsyncpa %s14, 0
    loop: start=0, step=1, limit=4
    $region2: #{tpu_custom_call.1} parent=1 // loop_pre_header
      _
    $region3: #{tpu_custom_call.1} parent=1 // loop_header
      %s17 = sphi 0, %s21
      %p18 = scmp.ge.s32.totalorder %s17, 4
      %s24 = sphi 0, %s36
      %s25 = sphi 0, %s32
      %s26 = sphi 0, %s24
      %s27 = sphi 0, %s25
      %s28 = sphi 0, %s26
      %s29 = sphi 0, %s27
      %s45 = sphi 0, %s47
      %s48 = sphi 0, %s45
      %s49 = sphi 0, %s48
      %s65 = sphi 0, %s49
      %s77 = sphi 0, %s79
      %s80 = sphi 0, %s77
      %s81 = sphi 0, %s80
      %s97 = sphi 0, %s81
      %s103 = sphi 0, %s105
      %s106 = sphi 0, %s103
      %s107 = sphi 0, %s106
      %s123 = sphi 0, %s107
    $region4: #{tpu_custom_call.1} parent=1 // loop_header_branch
      %20 = sbr.rel (%p18) target = $region8
    $region5: #{tpu_custom_call.1} parent=1 // loop_body
      %s22 = ssub.s32 %s17, 1
      %s23 = ssub.s32 %s17, 2
      %s30 = sadd.s32 1, %s25
      %p31 = scmp.ge.s32.totalorder %s30, 1
      %s32 = scalar_select %p31, 0, %s30
      %s33 = sadd.s32 1, %s24
      %s34 = scalar_select %p31, %s33, %s24
      %p35 = scmp.ge.s32.totalorder %s34, 2
      %s36 = scalar_select %p35, 0, %s34
      %s37 = sadd.s32 %s24, %s25
      %p38 = scmp.lt.s32.totalorder %s37, 0
      %s39 = scalar_select %p38, %s37, 0
      %s40 = sadd.s32 %s36, %s32
      %p41 = scmp.lt.s32.totalorder %s40, 0
      %s42 = scalar_select %p41, %s40, 0
      %s43 = ssub.s32 %s39, %s42
      %p44 = scmp.eq.s32.totalorder %s43, 0
      %s46 = sadd.s32 %s45, 1
      %s47 = scalar_select %p44, %s45, %s46
      %p50 = pneg %p44
      %p51 = scmp.eq.s32.totalorder %s17, 1
      %p52 = por %p50, %p51
      %p53 = scmp.ne.s32.totalorder %s45, %s48
      %p54 = scmp.eq.s32.totalorder %s17, 0
      %p55 = por %p53, %p54
      %p56 = scmp.ne.s32.totalorder %s45, %s48
      %p57 = scmp.eq.s32.totalorder %s22, 1
      %p58 = por %p56, %p57
      %p59 = scmp.ne.s32.totalorder %s48, %s49
      %p60 = scmp.eq.s32.totalorder %s22, 0
      %p61 = por %p59, %p60
      %p62 = scmp.ne.s32.totalorder %s48, %s49
      %p63 = scmp.eq.s32.totalorder %s23, 1
      %p64 = por %p62, %p63
      %p66 = scmp.ne.s32.totalorder %s49, %s65
      %p67 = scmp.eq.s32.totalorder %s23, 0
      %p68 = por %p66, %p67
      %s69 = sadd.s32 %s24, %s25
      %p70 = scmp.lt.s32.totalorder %s69, 0
      %s71 = scalar_select %p70, %s69, 0
      %s72 = sadd.s32 %s36, %s32
      %p73 = scmp.lt.s32.totalorder %s72, 0
      %s74 = scalar_select %p73, %s72, 0
      %s75 = ssub.s32 %s71, %s74
      %p76 = scmp.eq.s32.totalorder %s75, 0
      %s78 = sadd.s32 %s77, 1
      %s79 = scalar_select %p76, %s77, %s78
      %p82 = pneg %p76
      %p83 = scmp.eq.s32.totalorder %s17, 1
      %p84 = por %p82, %p83
      %p85 = scmp.ne.s32.totalorder %s77, %s80
      %p86 = scmp.eq.s32.totalorder %s17, 0
      %p87 = por %p85, %p86
      %p88 = scmp.ne.s32.totalorder %s77, %s80
      %p89 = scmp.eq.s32.totalorder %s22, 1
      %p90 = por %p88, %p89
      %p91 = scmp.ne.s32.totalorder %s80, %s81
      %p92 = scmp.eq.s32.totalorder %s22, 0
      %p93 = por %p91, %p92
      %p94 = scmp.ne.s32.totalorder %s80, %s81
      %p95 = scmp.eq.s32.totalorder %s23, 1
      %p96 = por %p94, %p95
      %p98 = scmp.ne.s32.totalorder %s81, %s97
      %p99 = scmp.eq.s32.totalorder %s23, 0
      %p100 = por %p98, %p99
      %s101 = ssub.s32 %s24, %s36
      %p102 = scmp.eq.s32.totalorder %s101, 0
      %s104 = sadd.s32 %s103, 1
      %s105 = scalar_select %p102, %s103, %s104
      %p108 = pneg %p102
      %p109 = scmp.eq.s32.totalorder %s17, 1
      %p110 = por %p108, %p109
      %p111 = scmp.ne.s32.totalorder %s103, %s106
      %p112 = scmp.eq.s32.totalorder %s17, 0
      %p113 = por %p111, %p112
      %p114 = scmp.ne.s32.totalorder %s103, %s106
      %p115 = scmp.eq.s32.totalorder %s22, 1
      %p116 = por %p114, %p115
      %p117 = scmp.ne.s32.totalorder %s106, %s107
      %p118 = scmp.eq.s32.totalorder %s22, 0
      %p119 = por %p117, %p118
      %p120 = scmp.ne.s32.totalorder %s106, %s107
      %p121 = scmp.eq.s32.totalorder %s23, 1
      %p122 = por %p120, %p121
      %p124 = scmp.ne.s32.totalorder %s107, %s123
      %p125 = scmp.eq.s32.totalorder %s23, 0
      %p126 = por %p124, %p125
      %p127 = scmp.le.s32.totalorder 1, %s17
      %p128 = scmp.lt.s32.totalorder %s17, 3
      %p129 = pnand %p127, %p128
      %p130 = pneg %p129
      // Predicated region
      $region9: #{tpu_custom_call.1} parent=5 // pred_check
        _
      $region10: #{tpu_custom_call.1} parent=5 // pred_check_branch
        %132 = sbr.rel (%p129) target = $region12
      $region11: #{tpu_custom_call.1} parent=5 // pred_region
        %s133 = ssub.s32 %s17, 1
      $region12: #{tpu_custom_call.1} parent=5 // pred_fallthru
        _
      %p134 = scmp.lt.s32.totalorder %s17, 2
      // Predicated region
      $region13: #{tpu_custom_call.1} parent=5 // pred_check
        %p135 = pneg %p134
      $region14: #{tpu_custom_call.1} parent=5 // pred_check_branch
        %137 = sbr.rel (%p135) target = $region16
      $region15: #{tpu_custom_call.1} parent=5 // pred_region
        // Predicated region
        $region17: #{tpu_custom_call.1} parent=15 // pred_check
          %p138 = pneg %p55
        $region18: #{tpu_custom_call.1} parent=15 // pred_check_branch
          %140 = sbr.rel (%p138) target = $region20
        $region19: #{tpu_custom_call.1} parent=15 // pred_region
          %s141 = sand.u32 %s45, 1
          %s142 = scalar_lea.sflag [#allocation3], %s141
          %s143 = sand.u32 %s45, 1
          %s144 = smul.addr %s143, 16
          %s145 = scalar_lea.vmem [#allocation2], %s144
          %s146 = sadd.s32 %s24, %s25
          %p147 = scmp.lt.s32.totalorder %s146, 0
          %s148 = scalar_select %p147, %s146, 0
          %s149 = smul.u32 2, %s148
          %s151 = ssub.s32 256, 256
          %152 = vsyncadd %s142, %s151
          %s153 = smul.addr %s149, 128
          %s154 = scalar_lea.hbm %s0, %s153
          %s155 = sshll.u32 %s145, 4
          %s156 = int_to_ptr.vmem [resolvable:$true] %s155
          %161 = dma.hbm_to_vmem [thread:$0]  %s154, 256, %s156, %s142, 128, 128, 8
        $region20: #{tpu_custom_call.1} parent=15 // pred_fallthru
          _
        // Predicated region
        $region21: #{tpu_custom_call.1} parent=15 // pred_check
          %p162 = pneg %p87
        $region22: #{tpu_custom_call.1} parent=15 // pred_check_branch
          %164 = sbr.rel (%p162) target = $region24
        $region23: #{tpu_custom_call.1} parent=15 // pred_region
          %s165 = sand.u32 %s77, 1
          %s166 = scalar_lea.sflag [#allocation6], %s165
          %s167 = sand.u32 %s77, 1
          %s168 = smul.addr %s167, 16
          %s169 = scalar_lea.vmem [#allocation5], %s168
          %s170 = sadd.s32 %s24, %s25
          %p171 = scmp.lt.s32.totalorder %s170, 0
          %s172 = scalar_select %p171, %s170, 0
          %s173 = smul.u32 2, %s172
          %s175 = ssub.s32 256, 256
          %176 = vsyncadd %s166, %s175
          %s177 = smul.addr %s173, 128
          %s178 = scalar_lea.hbm %s1, %s177
          %s179 = sshll.u32 %s169, 4
          %s180 = int_to_ptr.vmem [resolvable:$true] %s179
          %185 = dma.hbm_to_vmem [thread:$0]  %s178, 256, %s180, %s166, 128, 128, 8
        $region24: #{tpu_custom_call.1} parent=15 // pred_fallthru
          _
      $region16: #{tpu_custom_call.1} parent=5 // pred_fallthru
        _
      %p186 = scmp.le.s32.totalorder 1, %s17
      %p187 = scmp.lt.s32.totalorder %s17, 3
      %p188 = pnand %p186, %p187
      %p189 = pneg %p188
      // Predicated region
      $region25: #{tpu_custom_call.1} parent=5 // pred_check
        _
      $region26: #{tpu_custom_call.1} parent=5 // pred_check_branch
        %191 = sbr.rel (%p188) target = $region28
      $region27: #{tpu_custom_call.1} parent=5 // pred_region
        %s192 = ssub.s32 %s17, 1
        %s193 = sand.u32 %s48, 1
        %s194 = scalar_lea.sflag [#allocation3], %s193
        %s195 = sand.u32 %s48, 1
        %s196 = smul.addr %s195, 16
        %s197 = scalar_lea.vmem [#allocation2], %s196
        // Predicated region
        $region29: #{tpu_custom_call.1} parent=27 // pred_check
          %p198 = pneg %p61
        $region30: #{tpu_custom_call.1} parent=27 // pred_check_branch
          %200 = sbr.rel (%p198) target = $region32
        $region31: #{tpu_custom_call.1} parent=27 // pred_region
          %201 = dma.done %s194, 256
        $region32: #{tpu_custom_call.1} parent=27 // pred_fallthru
          _
        %s202 = sand.u32 %s80, 1
        %s203 = scalar_lea.sflag [#allocation6], %s202
        %s204 = sand.u32 %s80, 1
        %s205 = smul.addr %s204, 16
        %s206 = scalar_lea.vmem [#allocation5], %s205
        // Predicated region
        $region33: #{tpu_custom_call.1} parent=27 // pred_check
          %p207 = pneg %p93
        $region34: #{tpu_custom_call.1} parent=27 // pred_check_branch
          %209 = sbr.rel (%p207) target = $region36
        $region35: #{tpu_custom_call.1} parent=27 // pred_region
          %210 = dma.done %s203, 256
        $region36: #{tpu_custom_call.1} parent=27 // pred_fallthru
          _
        %s211 = sand.u32 %s48, 1
        %s212 = scalar_lea.sflag [#allocation3], %s211
        %s213 = sand.u32 %s48, 1
        %s214 = smul.addr %s213, 16
        %s215 = scalar_lea.vmem [#allocation2], %s214
        %p216 = pneg %p61
        %p217 = pneg %p58
        %s218 = sand.u32 %s80, 1
        %s219 = scalar_lea.sflag [#allocation6], %s218
        %s220 = sand.u32 %s80, 1
        %s221 = smul.addr %s220, 16
        %s222 = scalar_lea.vmem [#allocation5], %s221
        %p223 = pneg %p93
        %p224 = pneg %p90
        %p225 = pneg %p119
        %p226 = pneg %p116
        %s227 = sand.u32 %s106, 1
        %s228 = scalar_lea.sflag [#allocation4], %s227
        %s229 = sand.u32 %s106, 1
        %s230 = smul.addr %s229, 32
        %s231 = scalar_lea.vmem [#allocation7], %s230
        %s232 = sadd.s32 %s26, %s27
        %p233 = scmp.lt.s32.totalorder %s232, 0
        %s234 = scalar_select %p233, %s232, 0
        %s235 = smul.u32 2, %s234
        %s236 = sadd.s32 %s26, %s27
        %p237 = scmp.lt.s32.totalorder %s236, 0
        %s238 = scalar_select %p237, %s236, 0
        %s239 = smul.u32 2, %s238
        %s240 = sadd.s32 %s26, %s27
        %p241 = scmp.eq.s32.totalorder %s27, 0
        // Predicated region
        $region37: #{tpu_custom_call.1} parent=27 // pred_check
          %p242 = pneg %p241
        $region38: #{tpu_custom_call.1} parent=27 // pred_check_branch
          %244 = sbr.rel (%p242) target = $region40
        $region39: #{tpu_custom_call.1} parent=27 // pred_region
          %245 = vst [vmem:[%s231] sm:$0xff] 0.0
          %246 = vst [vmem:[%s231 + $0x8] sm:$0xff] 0.0
          %247 = vst [vmem:[%s231 + $0x10] sm:$0xff] 0.0
          %248 = vst [vmem:[%s231 + $0x18] sm:$0xff] 0.0
        $region40: #{tpu_custom_call.1} parent=27 // pred_fallthru
          _
        %p249 = scmp.lt.s32.totalorder %s240, 1
        // Predicated region
        $region41: #{tpu_custom_call.1} parent=27 // pred_check
          %p250 = pneg %p249
        $region42: #{tpu_custom_call.1} parent=27 // pred_check_branch
          %252 = sbr.rel (%p250) target = $region44
        $region43: #{tpu_custom_call.1} parent=27 // pred_region
          %v253 = vld [vmem:[%s197] sm:$0xff]
          %v254 = vld [vmem:[%s197 + $0x8] sm:$0xff]
          %v255 = vld [vmem:[%s206] sm:$0xff]
          %v256 = vld [vmem:[%s206 + $0x8] sm:$0xff]
          %v257 = vand.u32 2147483647, %v253
          %v258 = vand.u32 2147483647, %v254
          %v259 = vsub.f32 0.0, %v257
          %v260 = vsub.f32 0.0, %v258
          %v261 = vmul.f32 %v259, 1.442695
          %v262 = vpow.pop %v261
          %v263 = vmul.f32 %v260, 1.442695
          %v264 = vpow.pop %v263
          %v265 = vmax.f32 %v253, 0.0
          %v266 = vmax.f32 %v254, 0.0
          %v267 = vmul.f32 %v253, %v255
          %v268 = vmul.f32 %v254, %v256
          %v269 = vsub.f32 %v265, %v267
          %v270 = vsub.f32 %v266, %v268
          %v271 = vadd.f32 %v262, 1.0
          %v272 = vlog2.pop %v271
          %v273 = vmul.f32 %v272, 0.6931472
          %v274 = vmul.f32 -0.5, %v262
          %v275 = vadd.f32 %v274, 1.0
          %v276 = vmul.f32 %v275, %v262
          %v277 = vand.u32 2147483647, %v262
          %vm278 = vcmp.lt.f32.partialorder %v277, 0.0004427343
          %v279 = vsel %vm278, %v276, %v273
          %v280 = vadd.f32 %v264, 1.0
          %v281 = vlog2.pop %v280
          %v282 = vmul.f32 %v281, 0.6931472
          %v283 = vmul.f32 -0.5, %v264
          %v284 = vadd.f32 %v283, 1.0
          %v285 = vmul.f32 %v284, %v264
          %v286 = vand.u32 2147483647, %v264
          %vm287 = vcmp.lt.f32.partialorder %v286, 0.0004427343
          %v288 = vsel %vm287, %v285, %v282
          %v289 = vadd.f32 %v269, %v279
          %v290 = vadd.f32 %v270, %v288
          %v291 = vsub.f32 0.0, %v289
          %v292 = vsub.f32 0.0, %v290
          %v293 = vmul.f32 %v291, 1.442695
          %v294 = vpow.pop %v293
          %v295 = vmul.f32 %v292, 1.442695
          %v296 = vpow.pop %v295
          %v297 = vsub.f32 1.0, %v294
          %v298 = vsub.f32 1.0, %v296
          %v299 = vmax.f32 %v297, 0.0
          %v300 = vmax.f32 %v298, 0.0
          %v301 = vmul.f32 %v299, %v299
          %v302 = vmul.f32 %v300, %v300
          %v303 = vmul.f32 %v301, 0.8
          %v304 = vmul.f32 %v302, 0.8
          %v305 = vmul.f32 %v303, %v289
          %v306 = vmul.f32 %v304, %v290
          %vm307 = vcmp.ge.f32.partialorder %v253, 0.0
          %vm308 = vcmp.ge.f32.partialorder %v254, 0.0
          %v309 = vsel %vm307, 1.0, %v262
          %v310 = vsel %vm308, 1.0, %v264
          %v311 = vadd.f32 %v262, 1.0
          %v312 = vadd.f32 %v264, 1.0
          %v313 = vrcp.pop %v311
          %v314 = vmul.f32 %v309, %v313
          %v315 = vrcp.pop %v312
          %v316 = vmul.f32 %v310, %v315
          %v317 = vmul.f32 %v314, %v255
          %v318 = vmul.f32 %v316, %v256
          %v319 = vld [vmem:[%s231] sm:$0xff]
          %v320 = vadd.f32 %v305, %v306
          %v321 = vadd.f32 %v319, %v320
          %322 = vst [vmem:[%s231] sm:$0xff] %v321
          %s323 = scalar_lea.vmem %s231, 8 [#allocation7]
          %v324 = vld [vmem:[%s323] sm:$0xff]
          %v325 = vadd.f32 %v317, %v318
          %v326 = vadd.f32 %v324, %v325
          %327 = vst [vmem:[%s323] sm:$0xff] %v326
          %s328 = scalar_lea.vmem %s231, 16 [#allocation7]
          %v329 = vld [vmem:[%s328] sm:$0xff]
          %v330 = vadd.f32 %v314, %v316
          %v331 = vadd.f32 %v329, %v330
          %332 = vst [vmem:[%s328] sm:$0xff] %v331
          %s333 = scalar_lea.vmem %s231, 24 [#allocation7]
          %v334 = vld [vmem:[%s333] sm:$0xff]
          %v335 = vadd.f32 %v255, %v256
          %v336 = vadd.f32 %v334, %v335
          %337 = vst [vmem:[%s333] sm:$0xff] %v336
        $region44: #{tpu_custom_call.1} parent=27 // pred_fallthru
          _
        %p338 = scmp.ge.s32.totalorder %s240, 1
        // Predicated region
        $region45: #{tpu_custom_call.1} parent=27 // pred_check
          %p339 = pneg %p338
        $region46: #{tpu_custom_call.1} parent=27 // pred_check_branch
          %341 = sbr.rel (%p339) target = $region48
        $region47: #{tpu_custom_call.1} parent=27 // pred_region
          %v342 = vlaneseq
          %v343 = vshrl.u32 %v342, 7
          %v344 = vadd.s32 %v343, 8
          %v345 = vlaneseq
          %v346 = vand.u32 %v345, 127
          %s347 = smul.u32 %s240, 16
          %v348 = vstv %s347
          %v349 = vadd.s32 %v348, %v343
          %v350 = vadd.s32 %v348, %v344
          %v351 = vmul.u32 %v349, 128
          %v352 = vmul.u32 %v350, 128
          %v353 = vadd.s32 %v351, %v346
          %v354 = vadd.s32 %v352, %v346
          %vm355 = vcmp.lt.s32.totalorder %v353, 2048
          %vm356 = vcmp.lt.s32.totalorder %v354, 2048
          %v357 = vld [vmem:[%s197] sm:$0xff]
          %v358 = vld [vmem:[%s197 + $0x8] sm:$0xff]
          %v359 = vld [vmem:[%s206] sm:$0xff]
          %v360 = vld [vmem:[%s206 + $0x8] sm:$0xff]
          %v361 = vand.u32 2147483647, %v357
          %v362 = vand.u32 2147483647, %v358
          %v363 = vsub.f32 0.0, %v361
          %v364 = vsub.f32 0.0, %v362
          %v365 = vmul.f32 %v363, 1.442695
          %v366 = vpow.pop %v365
          %v367 = vmul.f32 %v364, 1.442695
          %v368 = vpow.pop %v367
          %v369 = vmax.f32 %v357, 0.0
          %v370 = vmax.f32 %v358, 0.0
          %v371 = vmul.f32 %v357, %v359
          %v372 = vmul.f32 %v358, %v360
          %v373 = vsub.f32 %v369, %v371
          %v374 = vsub.f32 %v370, %v372
          %v375 = vadd.f32 %v366, 1.0
          %v376 = vlog2.pop %v375
          %v377 = vmul.f32 %v376, 0.6931472
          %v378 = vmul.f32 -0.5, %v366
          %v379 = vadd.f32 %v378, 1.0
          %v380 = vmul.f32 %v379, %v366
          %v381 = vand.u32 2147483647, %v366
          %vm382 = vcmp.lt.f32.partialorder %v381, 0.0004427343
          %v383 = vsel %vm382, %v380, %v377
          %v384 = vadd.f32 %v368, 1.0
          %v385 = vlog2.pop %v384
          %v386 = vmul.f32 %v385, 0.6931472
          %v387 = vmul.f32 -0.5, %v368
          %v388 = vadd.f32 %v387, 1.0
          %v389 = vmul.f32 %v388, %v368
          %v390 = vand.u32 2147483647, %v368
          %vm391 = vcmp.lt.f32.partialorder %v390, 0.0004427343
          %v392 = vsel %vm391, %v389, %v386
          %v393 = vadd.f32 %v373, %v383
          %v394 = vadd.f32 %v374, %v392
          %v395 = vsub.f32 0.0, %v393
          %v396 = vsub.f32 0.0, %v394
          %v397 = vmul.f32 %v395, 1.442695
          %v398 = vpow.pop %v397
          %v399 = vmul.f32 %v396, 1.442695
          %v400 = vpow.pop %v399
          %v401 = vsub.f32 1.0, %v398
          %v402 = vsub.f32 1.0, %v400
          %v403 = vmax.f32 %v401, 0.0
          %v404 = vmax.f32 %v402, 0.0
          %v405 = vmul.f32 %v403, %v403
          %v406 = vmul.f32 %v404, %v404
          %v407 = vmul.f32 %v405, 0.8
          %v408 = vmul.f32 %v406, 0.8
          %v409 = vmul.f32 %v407, %v393
          %v410 = vmul.f32 %v408, %v394
          %vm411 = vcmp.ge.f32.partialorder %v357, 0.0
          %vm412 = vcmp.ge.f32.partialorder %v358, 0.0
          %v413 = vsel %vm411, 1.0, %v366
          %v414 = vsel %vm412, 1.0, %v368
          %v415 = vadd.f32 %v366, 1.0
          %v416 = vadd.f32 %v368, 1.0
          %v417 = vrcp.pop %v415
          %v418 = vmul.f32 %v413, %v417
          %v419 = vrcp.pop %v416
          %v420 = vmul.f32 %v414, %v419
          %v421 = vsel %vm355, %v409, 0.0
          %v422 = vsel %vm356, %v410, 0.0
          %v423 = vsel %vm355, %v418, 0.0
          %v424 = vsel %vm356, %v420, 0.0
          %v425 = vsel %vm355, %v359, 0.0
          %v426 = vsel %vm356, %v360, 0.0
          %v427 = vmul.f32 %v423, %v425
          %v428 = vmul.f32 %v424, %v426
          %v429 = vld [vmem:[%s231] sm:$0xff]
          %v430 = vadd.f32 %v421, %v422
          %v431 = vadd.f32 %v429, %v430
          %432 = vst [vmem:[%s231] sm:$0xff] %v431
          %s433 = scalar_lea.vmem %s231, 8 [#allocation7]
          %v434 = vld [vmem:[%s433] sm:$0xff]
          %v435 = vadd.f32 %v427, %v428
          %v436 = vadd.f32 %v434, %v435
          %437 = vst [vmem:[%s433] sm:$0xff] %v436
          %s438 = scalar_lea.vmem %s231, 16 [#allocation7]
          %v439 = vld [vmem:[%s438] sm:$0xff]
          %v440 = vadd.f32 %v423, %v424
          %v441 = vadd.f32 %v439, %v440
          %442 = vst [vmem:[%s438] sm:$0xff] %v441
          %s443 = scalar_lea.vmem %s231, 24 [#allocation7]
          %v444 = vld [vmem:[%s443] sm:$0xff]
          %v445 = vadd.f32 %v425, %v426
          %v446 = vadd.f32 %v444, %v445
          %447 = vst [vmem:[%s443] sm:$0xff] %v446
        $region48: #{tpu_custom_call.1} parent=27 // pred_fallthru
          _
        %s448 = sand.u32 %s106, 1
        %s449 = scalar_lea.sflag [#allocation4], %s448
        %s450 = sand.u32 %s106, 1
        %s451 = smul.addr %s450, 32
        %s452 = scalar_lea.vmem [#allocation7], %s451
        // Predicated region
        $region49: #{tpu_custom_call.1} parent=27 // pred_check
          %p453 = pneg %p116
        $region50: #{tpu_custom_call.1} parent=27 // pred_check_branch
          %455 = sbr.rel (%p453) target = $region52
        $region51: #{tpu_custom_call.1} parent=27 // pred_region
          %s457 = ssub.s32 512, 512
          %458 = vsyncadd %s449, %s457
          %s459 = smul.addr %s26, 4
          %s460 = smul.addr %s459, 128
          %s461 = scalar_lea.hbm %s2, %s460
          %s462 = sshll.u32 %s452, 4
          %s463 = int_to_ptr.vmem [resolvable:$true] %s462
          %468 = dma.vmem_to_hbm [thread:$0]  %s463, 512, %s461, %s449, 128, 128, 8
        $region52: #{tpu_custom_call.1} parent=27 // pred_fallthru
          _
      $region28: #{tpu_custom_call.1} parent=5 // pred_fallthru
        _
      %p469 = scmp.le.s32.totalorder 2, %s17
      // Predicated region
      $region53: #{tpu_custom_call.1} parent=5 // pred_check
        %p470 = pneg %p469
      $region54: #{tpu_custom_call.1} parent=5 // pred_check_branch
        %472 = sbr.rel (%p470) target = $region56
      $region55: #{tpu_custom_call.1} parent=5 // pred_region
        %s473 = ssub.s32 %s17, 2
        // Predicated region
        $region57: #{tpu_custom_call.1} parent=55 // pred_check
          %p474 = pneg %p122
        $region58: #{tpu_custom_call.1} parent=55 // pred_check_branch
          %476 = sbr.rel (%p474) target = $region60
        $region59: #{tpu_custom_call.1} parent=55 // pred_region
          %s477 = sand.u32 %s107, 1
          %s478 = scalar_lea.sflag [#allocation4], %s477
          %s479 = sand.u32 %s107, 1
          %s480 = smul.addr %s479, 32
          %s481 = scalar_lea.vmem [#allocation7], %s480
          %482 = dma.done %s478, 512
        $region60: #{tpu_custom_call.1} parent=55 // pred_fallthru
          _
      $region56: #{tpu_custom_call.1} parent=5 // pred_fallthru
        _
    $region6: #{tpu_custom_call.1} parent=1 // loop_footer
      %s21 = sadd.s32 1, %s17
    $region7: #{tpu_custom_call.1} parent=1 // loop_footer_branch
      %16 = sbr.rel target = $region3
    $region8: #{tpu_custom_call.1} parent=1 // loop_exit
      _
    %483 = vsyncpa [#allocation3], 1
    %s484 = scalar_lea.sflag [#allocation3], 1
    %485 = vsyncpa %s484, 1
    %486 = vsyncpa [#allocation6], 1
    %s487 = scalar_lea.sflag [#allocation6], 1
    %488 = vsyncpa %s487, 1
    %489 = vsyncpa [#allocation4], 1
    %s490 = scalar_lea.sflag [#allocation4], 1
    %491 = vsyncpa %s490, 1

</llo_original>
